<compile_context>
chip_gen: v6e
topology: v6e:2x2x1
jax: 0.10.0
libtpu: 0.0.40
codegen_flags: <defaults>
</compile_context>

<pallas_src>
import math
import functools

import jax
import jax.numpy as jnp
from jax import lax
from jax.experimental import pallas as pl
from jax.experimental.pallas import tpu as pltpu


def _sdpa_kernel(*refs, scale, has_mask):
    """Grid = (B, ceil(Sq/tq)). One (batch, query-tile) block per step.

    q_ref    : (1, tq, D)
    k_ref    : (1, Sk, D)
    v_ref    : (1, Sk, Dv)
    mask_ref : (1, tq, Sk) int8   (only if has_mask)
    out_ref  : (1, tq, Dv)
    attn_ref : (1, tq, Sk)
    """
    if has_mask:
        q_ref, k_ref, v_ref, mask_ref, out_ref, attn_ref = refs
    else:
        q_ref, k_ref, v_ref, out_ref, attn_ref = refs
        mask_ref = None

    # Keep MXU operands in their native dtype; fold 1/sqrt(d) into q.
    q = q_ref[0]
    if scale != 1.0:
        q = q * jnp.asarray(scale, dtype=q.dtype)                 # (tq, D)
    k = k_ref[0]                                                  # (Sk, D)

    # scores = q @ k^T ; contract on last dims directly (no explicit .T),
    # f32 accumulation on the MXU.
    scores = lax.dot_general(
        q, k, (((1,), (1,)), ((), ())),
        preferred_element_type=jnp.float32)                       # (tq, Sk) f32

    if has_mask:
        scores = jnp.where(mask_ref[0] == 0, jnp.float32(-1e9), scores)

    # Numerically stable softmax along the key axis (torch Softmax(dim=2)).
    m = jnp.max(scores, axis=-1, keepdims=True)
    e = jnp.exp(scores - m)                                       # (tq, Sk) f32
    denom = jnp.sum(e, axis=-1, keepdims=True)                    # (tq, 1)
    inv = 1.0 / denom                                             # exact; tiny (tq,1)

    attn_ref[0] = (e * inv).astype(attn_ref.dtype)

    # PV matmul on unnormalized probabilities in v's dtype (bf16 full-rate MXU
    # path when inputs are bf16); normalize the small (tq, Dv) result after.
    p = e.astype(v_ref.dtype)                                     # (tq, Sk)
    out = jnp.dot(p, v_ref[0], preferred_element_type=jnp.float32) * inv
    out_ref[0] = out.astype(out_ref.dtype)


def scaled_dot_product_attention(q, k, v, mask=None, *, scale=True):
    """q: [B,Sq,D], k: [B,Sk,D], v: [B,Sk,Dv], mask (optional): [B,Sq,Sk].

    Returns (output [B,Sq,Dv], attn [B,Sq,Sk]) matching the PyTorch module
    with dropout disabled. attn is returned in q's dtype.
    """
    B, Sq, D = q.shape
    Bk, Sk, Dk = k.shape
    Bv, Sv, Dv = v.shape
    assert Bk == B and Bv == B and Dk == D and Sv == Sk

    # Query-axis tile: full Sq for short sequences; otherwise a fixed
    # MXU-friendly tile with a cdiv grid (Pallas clips the partial last tile).
    if Sq <= 128:
        tq = Sq
    elif Sq % 256 == 0:
        tq = 256          # fills the 256-wide MXU on v6e/v7x, halves step count
    else:
        tq = 128
    grid = (B, pl.cdiv(Sq, tq))

    scale_val = (1.0 / math.sqrt(D)) if scale else 1.0
    has_mask = mask is not None

    in_specs = [
        pl.BlockSpec((1, tq, D), lambda b, i: (b, i, 0)),    # q tile
        pl.BlockSpec((1, Sk, D), lambda b, i: (b, 0, 0)),    # full k (per batch)
        pl.BlockSpec((1, Sk, Dv), lambda b, i: (b, 0, 0)),   # full v (per batch)
    ]
    args = [q, k, v]
    if has_mask:
        # int8 mask: 4x less HBM read than int32/f32 for the same tile.
        mask_i8 = (mask != 0).astype(jnp.int8)
        in_specs.append(pl.BlockSpec((1, tq, Sk), lambda b, i: (b, i, 0)))
        args.append(mask_i8)

    attn_dtype = q.dtype   # emit attn in input dtype (halves writeback for bf16)

    kernel = functools.partial(_sdpa_kernel, scale=scale_val, has_mask=has_mask)

    # Explicit VMEM budget: double-buffered tiles + in-kernel f32 temporaries.
    itemsize = q.dtype.itemsize
    est = (2 * (tq * D + Sk * D + Sk * Dv + tq * Dv) * itemsize
           + 2 * tq * Sk * jnp.zeros((), attn_dtype).dtype.itemsize
           + (2 * tq * Sk if has_mask else 0)
           + 4 * tq * Sk * 4)
    vmem_limit = int(min(max(2 * est, 32 * 1024 * 1024), 64 * 1024 * 1024))

    # NOTE: Dv < 128 means the (1, tq, Dv) output block uses masked partial
    # lane stores; if this feeds a projection, consider fusing or packing
    # heads into the lane dim.
    out, attn = pl.pallas_call(
        kernel,
        out_shape=(
            jax.ShapeDtypeStruct((B, Sq, Dv), q.dtype),
            jax.ShapeDtypeStruct((B, Sq, Sk), attn_dtype),
        ),
        grid_spec=pltpu.PrefetchScalarGridSpec(
            num_scalar_prefetch=0,
            grid=grid,
            in_specs=in_specs,
            out_specs=[
                pl.BlockSpec((1, tq, Dv), lambda b, i: (b, i, 0)),   # output
                pl.BlockSpec((1, tq, Sk), lambda b, i: (b, i, 0)),   # attn
            ],
        ),
        compiler_params=pltpu.CompilerParams(
            dimension_semantics=("parallel", "parallel"),
            vmem_limit_bytes=vmem_limit),
    )(*args)

    return out, attn


def _reference(q, k, v, mask=None, scale=True):
    """Pure-JAX reference mirroring the PyTorch forward (dropout=identity)."""
    attn = jnp.einsum("bqd,bkd->bqk", q, k)
    if scale:
        attn = attn / jnp.sqrt(jnp.float32(k.shape[-1]))
    if mask is not None:
        attn = jnp.where(mask == 0, jnp.float32(-1e9), attn)
    attn = jax.nn.softmax(attn, axis=2)
    output = jnp.einsum("bqk,bkd->bqd", attn, v)
    return output, attn


if __name__ == "__main__":
    key = jax.random.PRNGKey(0)
    B, Sq, Sk, D = 2, 8, 8, 32

    k1, k2, k3 = jax.random.split(key, 3)
    q = jax.random.normal(k1, (B, Sq, D), dtype=jnp.float32)
    k = jax.random.normal(k2, (B, Sk, D), dtype=jnp.float32)
    v = jax.random.normal(k3, (B, Sk, D), dtype=jnp.float32)

    # --- unmasked path ---
    out, attn = scaled_dot_product_attention(q, k, v, mask=None, scale=True)
    out = jax.block_until_ready(out)
    attn = jax.block_until_ready(attn)

    ref_out, ref_attn = _reference(q, k, v, mask=None, scale=True)
    assert out.shape == (B, Sq, D) and attn.shape == (B, Sq, Sk)
    assert jnp.allclose(out, ref_out, atol=1e-3, rtol=1e-3)
    assert jnp.allclose(attn, ref_attn, atol=1e-3, rtol=1e-3)

    # --- masked path (causal mask; every row keeps >=1 valid key) ---
    causal = (jnp.arange(Sk)[None, :] <= jnp.arange(Sq)[:, None]).astype(jnp.int32)
    mask = jnp.broadcast_to(causal, (B, Sq, Sk))

    out_m, attn_m = scaled_dot_product_attention(q, k, v, mask=mask, scale=True)
    out_m = jax.block_until_ready(out_m)
    attn_m = jax.block_until_ready(attn_m)

    ref_out_m, ref_attn_m = _reference(q, k, v, mask=mask, scale=True)
    assert jnp.allclose(out_m, ref_out_m, atol=1e-3, rtol=1e-3)
    assert jnp.allclose(attn_m, ref_attn_m, atol=1e-3, rtol=1e-3)

    print("KERNEL_OK")
</pallas_src>

<mosaic_0001>
module attributes {stable_mosaic.version = 11 : i64} {
  func.func @_sdpa_kernel(%arg0: i32, %arg1: i32, %arg2: memref<1x8x32xf32, #tpu.memory_space<vmem>>, %arg3: memref<1x8x32xf32, #tpu.memory_space<vmem>>, %arg4: memref<1x8x32xf32, #tpu.memory_space<vmem>>, %arg5: memref<1x8x32xf32, #tpu.memory_space<vmem>>, %arg6: memref<1x8x8xf32, #tpu.memory_space<vmem>>) attributes {dimension_semantics = [#tpu.dimension_semantics<parallel>, #tpu.dimension_semantics<parallel>], iteration_bounds = array<i64: 2, 1>, scalar_prefetch = 0 : i64, scratch_operands = 0 : i64, tpu.core_type = #tpu.core_type<tc>, window_params = [{transform_indices = @transform_0, window_bounds = array<i64: 1, 8, 32>}, {transform_indices = @transform_1, window_bounds = array<i64: 1, 8, 32>}, {transform_indices = @transform_2, window_bounds = array<i64: 1, 8, 32>}, {transform_indices = @transform_3, window_bounds = array<i64: 1, 8, 32>}, {transform_indices = @transform_4, window_bounds = array<i64: 1, 8, 8>}]} {
    %c0 = arith.constant 0 : index
    %c0_0 = arith.constant 0 : index
    %c0_1 = arith.constant 0 : index
    %0 = vector.load %arg2[%c0, %c0_0, %c0_1] : memref<1x8x32xf32, #tpu.memory_space<vmem>>, vector<1x8x32xf32>
    %1 = vector.shape_cast %0 : vector<1x8x32xf32> to vector<8x32xf32>
    %cst = arith.constant 0.176776692 : f32
    %2 = vector.broadcast %cst : f32 to vector<8x32xf32>
    %3 = arith.mulf %1, %2 : vector<8x32xf32>
    %c0_2 = arith.constant 0 : index
    %c0_3 = arith.constant 0 : index
    %c0_4 = arith.constant 0 : index
    %4 = vector.load %arg3[%c0_2, %c0_3, %c0_4] : memref<1x8x32xf32, #tpu.memory_space<vmem>>, vector<1x8x32xf32>
    %5 = vector.shape_cast %4 : vector<1x8x32xf32> to vector<8x32xf32>
    %cst_5 = arith.constant dense<0.000000e+00> : vector<8x8xf32>
    %6 = tpu.matmul %3, %5, %cst_5 {dimension_numbers = #tpu.dot_dimension_numbers<[1], [1], [0], [0], [0, 0, 1, 0], [], []>} : vector<8x32xf32>, vector<8x32xf32>, vector<8x8xf32> -> vector<8x8xf32>
    %cst_6 = arith.constant dense<0xFF800000> : vector<8xf32>
    %7 = vector.multi_reduction <maximumf>, %6, %cst_6 [1] : vector<8x8xf32> to vector<8xf32>
    %8 = vector.shape_cast %7 : vector<8xf32> to vector<8x1xf32>
    %9 = vector.broadcast %8 : vector<8x1xf32> to vector<8x8xf32>
    %10 = arith.subf %6, %9 : vector<8x8xf32>
    %11 = math.exp %10 : vector<8x8xf32>
    %cst_7 = arith.constant dense<0.000000e+00> : vector<8xf32>
    %12 = vector.multi_reduction <add>, %11, %cst_7 [1] : vector<8x8xf32> to vector<8xf32>
    %13 = vector.shape_cast %12 : vector<8xf32> to vector<8x1xf32>
    %cst_8 = arith.constant 1.000000e+00 : f32
    %14 = vector.broadcast %cst_8 : f32 to vector<8x1xf32>
    %15 = arith.divf %14, %13 : vector<8x1xf32>
    %16 = vector.broadcast %15 : vector<8x1xf32> to vector<8x8xf32>
    %17 = arith.mulf %11, %16 : vector<8x8xf32>
    %c0_9 = arith.constant 0 : index
    %c0_10 = arith.constant 0 : index
    %c0_11 = arith.constant 0 : index
    %18 = vector.load %arg6[%c0_9, %c0_10, %c0_11] : memref<1x8x8xf32, #tpu.memory_space<vmem>>, vector<1x8x8xf32>
    %19 = vector.shape_cast %18 : vector<1x8x8xf32> to vector<8x8xf32>
    %20 = vector.shape_cast %17 : vector<8x8xf32> to vector<1x8x8xf32>
    tpu.vector_store %arg6[%c0_9, %c0_10, %c0_11], %20 {strides = array<i32>} : memref<1x8x8xf32, #tpu.memory_space<vmem>>, vector<1x8x8xf32>,
    %c0_12 = arith.constant 0 : index
    %c0_13 = arith.constant 0 : index
    %c0_14 = arith.constant 0 : index
    %21 = vector.load %arg4[%c0_12, %c0_13, %c0_14] : memref<1x8x32xf32, #tpu.memory_space<vmem>>, vector<1x8x32xf32>
    %22 = vector.shape_cast %21 : vector<1x8x32xf32> to vector<8x32xf32>
    %cst_15 = arith.constant dense<0.000000e+00> : vector<8x32xf32>
    %23 = tpu.matmul %11, %22, %cst_15 {dimension_numbers = #tpu.dot_dimension_numbers<[1], [0], [0], [1], [0, 0, 1, 1], [], []>} : vector<8x8xf32>, vector<8x32xf32>, vector<8x32xf32> -> vector<8x32xf32>
    %24 = vector.broadcast %15 : vector<8x1xf32> to vector<8x32xf32>
    %25 = arith.mulf %23, %24 : vector<8x32xf32>
    %c0_16 = arith.constant 0 : index
    %c0_17 = arith.constant 0 : index
    %c0_18 = arith.constant 0 : index
    %26 = vector.load %arg5[%c0_16, %c0_17, %c0_18] : memref<1x8x32xf32, #tpu.memory_space<vmem>>, vector<1x8x32xf32>
    %27 = vector.shape_cast %26 : vector<1x8x32xf32> to vector<8x32xf32>
    %28 = vector.shape_cast %25 : vector<8x32xf32> to vector<1x8x32xf32>
    tpu.vector_store %arg5[%c0_16, %c0_17, %c0_18], %28 {strides = array<i32>} : memref<1x8x32xf32, #tpu.memory_space<vmem>>, vector<1x8x32xf32>,
    return
  }
  func.func @transform_0(%arg0: i32, %arg1: i32) -> (i32, i32, i32) {
    %c0_i32 = arith.constant 0 : i32
    %c0_i32_0 = arith.constant 0 : i32
    return %arg0, %arg1, %c0_i32 : i32, i32, i32
  }
  func.func @transform_1(%arg0: i32, %arg1: i32) -> (i32, i32, i32) {
    %c0_i32 = arith.constant 0 : i32
    %c0_i32_0 = arith.constant 0 : i32
    %c0_i32_1 = arith.constant 0 : i32
    return %arg0, %c0_i32, %c0_i32_0 : i32, i32, i32
  }
  func.func @transform_2(%arg0: i32, %arg1: i32) -> (i32, i32, i32) {
    %c0_i32 = arith.constant 0 : i32
    %c0_i32_0 = arith.constant 0 : i32
    %c0_i32_1 = arith.constant 0 : i32
    return %arg0, %c0_i32, %c0_i32_0 : i32, i32, i32
  }
  func.func @transform_3(%arg0: i32, %arg1: i32) -> (i32, i32, i32) {
    %c0_i32 = arith.constant 0 : i32
    %c0_i32_0 = arith.constant 0 : i32
    return %arg0, %arg1, %c0_i32 : i32, i32, i32
  }
  func.func @transform_4(%arg0: i32, %arg1: i32) -> (i32, i32, i32) {
    %c0_i32 = arith.constant 0 : i32
    %c0_i32_0 = arith.constant 0 : i32
    return %arg0, %arg1, %c0_i32 : i32, i32, i32
  }
}

</mosaic_0001>

<llo_original>
// kernel: tpu_custom_call.1
$region0: #{tpu_custom_call.1}
  #allocation0 [shape = 'u32[]', space=smem, size = 0x4, offset = 0x4, fixed_abs, tag = 'smem constant byte address 0x4 - core index']
  #allocation1 [shape = 'u32[144,128]{1,0:T(1,128)}', space=vmem, size = 0x12000, scoped, tag = 'internal scratch']
  %s0 = inlined_call_operand.hbm [shape: f32[2,8,32], index: 0, kind: input, shape index: {}]
  %s1 = inlined_call_operand.hbm [shape: f32[2,8,32], index: 1, kind: input, shape index: {}]
  %s2 = inlined_call_operand.hbm [shape: f32[2,8,32], index: 2, kind: input, shape index: {}]
  %s3 = inlined_call_operand.hbm [shape: f32[2,8,32], index: 3, kind: output, shape index: {0}]
  %s4 = inlined_call_operand.hbm [shape: f32[2,8,8], index: 4, kind: output, shape index: {1}]
  %5 = xla_tuple %s3, %s4
  %s6 = sld [smem:[#allocation0]]
  $region65: #{tpu_custom_call.1} parent=0
    _
  %s8 = ssub.s32 1, %s6
  %s9 = scalar_select 0, %s8, %s6
  $region1: #{tpu_custom_call.1} parent=0
    #allocation2 [shape = 'u8[8192]{0}', space=vmem, size = 0x2000, scoped, tag = 'input window, operand 0']
    #allocation3 [shape = 's32[2]{0}', space=sflag, size = 0x8, scoped, tag = 'scoped memory for tpu_custom_call.1']
    #allocation4 [shape = 's32[2]{0}', space=sflag, size = 0x8, scoped, tag = 'scoped memory for tpu_custom_call.1']
    #allocation5 [shape = 'u8[8192]{0}', space=vmem, size = 0x2000, scoped, tag = 'input window, operand 1']
    #allocation6 [shape = 's32[2]{0}', space=sflag, size = 0x8, scoped, tag = 'scoped memory for tpu_custom_call.1']
    #allocation7 [shape = 'u8[8192]{0}', space=vmem, size = 0x2000, scoped, tag = 'input window, operand 2']
    #allocation8 [shape = 'u8[8192]{0}', space=vmem, size = 0x2000, scoped, tag = 'output window, operand 0']
    #allocation9 [shape = 'u8[8192]{0}', space=vmem, size = 0x2000, scoped, tag = 'output window, operand 1']
    #allocation10 [shape = 's32[2]{0}', space=sflag, size = 0x8, scoped, tag = 'scoped memory for tpu_custom_call.1']
    %10 = vsyncpa [#allocation3], 0
    %s11 = scalar_lea.sflag [#allocation3], 1
    %12 = vsyncpa %s11, 0
    %13 = vsyncpa [#allocation6], 0
    %s14 = scalar_lea.sflag [#allocation6], 1
    %15 = vsyncpa %s14, 0
    %16 = vsyncpa [#allocation4], 0
    %s17 = scalar_lea.sflag [#allocation4], 1
    %18 = vsyncpa %s17, 0
    %19 = vsyncpa [#allocation10], 0
    %s20 = scalar_lea.sflag [#allocation10], 1
    %21 = vsyncpa %s20, 0
    loop: start=0, step=1, limit=4
    $region2: #{tpu_custom_call.1} parent=1 // loop_pre_header
      _
    $region3: #{tpu_custom_call.1} parent=1 // loop_header
      %s23 = sphi 0, %s27
      %p24 = scmp.ge.s32.totalorder %s23, 4
      %s30 = sphi 0, %s42
      %s31 = sphi 0, %s38
      %s32 = sphi 0, %s30
      %s33 = sphi 0, %s31
      %s34 = sphi 0, %s32
      %s35 = sphi 0, %s33
      %s47 = sphi 0, %s49
      %s50 = sphi 0, %s47
      %s51 = sphi 0, %s50
      %s67 = sphi 0, %s51
      %s73 = sphi 0, %s75
      %s76 = sphi 0, %s73
      %s77 = sphi 0, %s76
      %s93 = sphi 0, %s77
      %s99 = sphi 0, %s101
      %s102 = sphi 0, %s99
      %s103 = sphi 0, %s102
      %s119 = sphi 0, %s103
      %s127 = sphi 0, %s129
      %s130 = sphi 0, %s127
      %s131 = sphi 0, %s130
      %s147 = sphi 0, %s131
      %s155 = sphi 0, %s157
      %s158 = sphi 0, %s155
      %s159 = sphi 0, %s158
      %s175 = sphi 0, %s159
    $region4: #{tpu_custom_call.1} parent=1 // loop_header_branch
      %26 = sbr.rel (%p24) target = $region8
    $region5: #{tpu_custom_call.1} parent=1 // loop_body
      %s28 = ssub.s32 %s23, 1
      %s29 = ssub.s32 %s23, 2
      %s36 = sadd.s32 1, %s31
      %p37 = scmp.ge.s32.totalorder %s36, 1
      %s38 = scalar_select %p37, 0, %s36
      %s39 = sadd.s32 1, %s30
      %s40 = scalar_select %p37, %s39, %s30
      %p41 = scmp.ge.s32.totalorder %s40, 2
      %s42 = scalar_select %p41, 0, %s40
      %s43 = ssub.s32 %s30, %s42
      %s44 = ssub.s32 %s31, %s38
      %s45 = sor.u32 %s43, %s44
      %p46 = scmp.eq.s32.totalorder %s45, 0
      %s48 = sadd.s32 %s47, 1
      %s49 = scalar_select %p46, %s47, %s48
      %p52 = pneg %p46
      %p53 = scmp.eq.s32.totalorder %s23, 1
      %p54 = por %p52, %p53
      %p55 = scmp.ne.s32.totalorder %s47, %s50
      %p56 = scmp.eq.s32.totalorder %s23, 0
      %p57 = por %p55, %p56
      %p58 = scmp.ne.s32.totalorder %s47, %s50
      %p59 = scmp.eq.s32.totalorder %s28, 1
      %p60 = por %p58, %p59
      %p61 = scmp.ne.s32.totalorder %s50, %s51
      %p62 = scmp.eq.s32.totalorder %s28, 0
      %p63 = por %p61, %p62
      %p64 = scmp.ne.s32.totalorder %s50, %s51
      %p65 = scmp.eq.s32.totalorder %s29, 1
      %p66 = por %p64, %p65
      %p68 = scmp.ne.s32.totalorder %s51, %s67
      %p69 = scmp.eq.s32.totalorder %s29, 0
      %p70 = por %p68, %p69
      %s71 = ssub.s32 %s30, %s42
      %p72 = scmp.eq.s32.totalorder %s71, 0
      %s74 = sadd.s32 %s73, 1
      %s75 = scalar_select %p72, %s73, %s74
      %p78 = pneg %p72
      %p79 = scmp.eq.s32.totalorder %s23, 1
      %p80 = por %p78, %p79
      %p81 = scmp.ne.s32.totalorder %s73, %s76
      %p82 = scmp.eq.s32.totalorder %s23, 0
      %p83 = por %p81, %p82
      %p84 = scmp.ne.s32.totalorder %s73, %s76
      %p85 = scmp.eq.s32.totalorder %s28, 1
      %p86 = por %p84, %p85
      %p87 = scmp.ne.s32.totalorder %s76, %s77
      %p88 = scmp.eq.s32.totalorder %s28, 0
      %p89 = por %p87, %p88
      %p90 = scmp.ne.s32.totalorder %s76, %s77
      %p91 = scmp.eq.s32.totalorder %s29, 1
      %p92 = por %p90, %p91
      %p94 = scmp.ne.s32.totalorder %s77, %s93
      %p95 = scmp.eq.s32.totalorder %s29, 0
      %p96 = por %p94, %p95
      %s97 = ssub.s32 %s30, %s42
      %p98 = scmp.eq.s32.totalorder %s97, 0
      %s100 = sadd.s32 %s99, 1
      %s101 = scalar_select %p98, %s99, %s100
      %p104 = pneg %p98
      %p105 = scmp.eq.s32.totalorder %s23, 1
      %p106 = por %p104, %p105
      %p107 = scmp.ne.s32.totalorder %s99, %s102
      %p108 = scmp.eq.s32.totalorder %s23, 0
      %p109 = por %p107, %p108
      %p110 = scmp.ne.s32.totalorder %s99, %s102
      %p111 = scmp.eq.s32.totalorder %s28, 1
      %p112 = por %p110, %p111
      %p113 = scmp.ne.s32.totalorder %s102, %s103
      %p114 = scmp.eq.s32.totalorder %s28, 0
      %p115 = por %p113, %p114
      %p116 = scmp.ne.s32.totalorder %s102, %s103
      %p117 = scmp.eq.s32.totalorder %s29, 1
      %p118 = por %p116, %p117
      %p120 = scmp.ne.s32.totalorder %s103, %s119
      %p121 = scmp.eq.s32.totalorder %s29, 0
      %p122 = por %p120, %p121
      %s123 = ssub.s32 %s30, %s42
      %s124 = ssub.s32 %s31, %s38
      %s125 = sor.u32 %s123, %s124
      %p126 = scmp.eq.s32.totalorder %s125, 0
      %s128 = sadd.s32 %s127, 1
      %s129 = scalar_select %p126, %s127, %s128
      %p132 = pneg %p126
      %p133 = scmp.eq.s32.totalorder %s23, 1
      %p134 = por %p132, %p133
      %p135 = scmp.ne.s32.totalorder %s127, %s130
      %p136 = scmp.eq.s32.totalorder %s23, 0
      %p137 = por %p135, %p136
      %p138 = scmp.ne.s32.totalorder %s127, %s130
      %p139 = scmp.eq.s32.totalorder %s28, 1
      %p140 = por %p138, %p139
      %p141 = scmp.ne.s32.totalorder %s130, %s131
      %p142 = scmp.eq.s32.totalorder %s28, 0
      %p143 = por %p141, %p142
      %p144 = scmp.ne.s32.totalorder %s130, %s131
      %p145 = scmp.eq.s32.totalorder %s29, 1
      %p146 = por %p144, %p145
      %p148 = scmp.ne.s32.totalorder %s131, %s147
      %p149 = scmp.eq.s32.totalorder %s29, 0
      %p150 = por %p148, %p149
      %s151 = ssub.s32 %s30, %s42
      %s152 = ssub.s32 %s31, %s38
      %s153 = sor.u32 %s151, %s152
      %p154 = scmp.eq.s32.totalorder %s153, 0
      %s156 = sadd.s32 %s155, 1
      %s157 = scalar_select %p154, %s155, %s156
      %p160 = pneg %p154
      %p161 = scmp.eq.s32.totalorder %s23, 1
      %p162 = por %p160, %p161
      %p163 = scmp.ne.s32.totalorder %s155, %s158
      %p164 = scmp.eq.s32.totalorder %s23, 0
      %p165 = por %p163, %p164
      %p166 = scmp.ne.s32.totalorder %s155, %s158
      %p167 = scmp.eq.s32.totalorder %s28, 1
      %p168 = por %p166, %p167
      %p169 = scmp.ne.s32.totalorder %s158, %s159
      %p170 = scmp.eq.s32.totalorder %s28, 0
      %p171 = por %p169, %p170
      %p172 = scmp.ne.s32.totalorder %s158, %s159
      %p173 = scmp.eq.s32.totalorder %s29, 1
      %p174 = por %p172, %p173
      %p176 = scmp.ne.s32.totalorder %s159, %s175
      %p177 = scmp.eq.s32.totalorder %s29, 0
      %p178 = por %p176, %p177
      %p179 = scmp.le.s32.totalorder 1, %s23
      %p180 = scmp.lt.s32.totalorder %s23, 3
      %p181 = pnand %p179, %p180
      %p182 = pneg %p181
      // Predicated region
      $region9: #{tpu_custom_call.1} parent=5 // pred_check
        _
      $region10: #{tpu_custom_call.1} parent=5 // pred_check_branch
        %184 = sbr.rel (%p181) target = $region12
      $region11: #{tpu_custom_call.1} parent=5 // pred_region
        %s185 = ssub.s32 %s23, 1
      $region12: #{tpu_custom_call.1} parent=5 // pred_fallthru
        _
      %p186 = scmp.lt.s32.totalorder %s23, 2
      // Predicated region
      $region13: #{tpu_custom_call.1} parent=5 // pred_check
        %p187 = pneg %p186
      $region14: #{tpu_custom_call.1} parent=5 // pred_check_branch
        %189 = sbr.rel (%p187) target = $region16
      $region15: #{tpu_custom_call.1} parent=5 // pred_region
        // Predicated region
        $region17: #{tpu_custom_call.1} parent=15 // pred_check
          %p190 = pneg %p57
        $region18: #{tpu_custom_call.1} parent=15 // pred_check_branch
          %192 = sbr.rel (%p190) target = $region20
        $region19: #{tpu_custom_call.1} parent=15 // pred_region
          %s193 = sand.u32 %s47, 1
          %s194 = scalar_lea.sflag [#allocation3], %s193
          %s195 = sand.u32 %s47, 1
          %s196 = smul.addr %s195, 8
          %s197 = scalar_lea.vmem [#allocation2], %s196
          %s199 = ssub.s32 128, 128
          %200 = vsyncadd %s194, %s199
          %s201 = sadd.s32 %s31, %s30
          %s202 = smul.addr %s201, 128
          %s203 = scalar_lea.hbm %s0, %s202
          %s205 = sshll.u32 %s197, 4
          %s206 = int_to_ptr.vmem [resolvable:$true] %s205
          %208 = dma.hbm_to_vmem [thread:$0]  %s203, 128, %s206, %s194
        $region20: #{tpu_custom_call.1} parent=15 // pred_fallthru
          _
        // Predicated region
        $region21: #{tpu_custom_call.1} parent=15 // pred_check
          %p209 = pneg %p83
        $region22: #{tpu_custom_call.1} parent=15 // pred_check_branch
          %211 = sbr.rel (%p209) target = $region24
        $region23: #{tpu_custom_call.1} parent=15 // pred_region
          %s212 = sand.u32 %s23, 1
          %s213 = scalar_lea.sflag [#allocation6], %s212
          %s214 = sand.u32 %s73, 1
          %s215 = smul.addr %s214, 8
          %s216 = scalar_lea.vmem [#allocation5], %s215
          %s218 = ssub.s32 128, 128
          %219 = vsyncadd %s213, %s218
          %s220 = smul.addr %s30, 128
          %s221 = scalar_lea.hbm %s1, %s220
          %s223 = sshll.u32 %s216, 4
          %s224 = int_to_ptr.vmem [resolvable:$true] %s223
          %226 = dma.hbm_to_vmem [thread:$0]  %s221, 128, %s224, %s213
        $region24: #{tpu_custom_call.1} parent=15 // pred_fallthru
          _
        // Predicated region
        $region25: #{tpu_custom_call.1} parent=15 // pred_check
          %p227 = pneg %p109
        $region26: #{tpu_custom_call.1} parent=15 // pred_check_branch
          %229 = sbr.rel (%p227) target = $region28
        $region27: #{tpu_custom_call.1} parent=15 // pred_region
          %s230 = sand.u32 %s23, 1
          %s231 = scalar_lea.sflag [#allocation6], %s230
          %s232 = sand.u32 %s99, 1
          %s233 = smul.addr %s232, 8
          %s234 = scalar_lea.vmem [#allocation7], %s233
          %s236 = ssub.s32 128, 128
          %237 = vsyncadd %s231, %s236
          %s238 = smul.addr %s30, 128
          %s239 = scalar_lea.hbm %s2, %s238
          %s241 = sshll.u32 %s234, 4
          %s242 = int_to_ptr.vmem [resolvable:$true] %s241
          %244 = dma.hbm_to_vmem [thread:$0]  %s239, 128, %s242, %s231
        $region28: #{tpu_custom_call.1} parent=15 // pred_fallthru
          _
      $region16: #{tpu_custom_call.1} parent=5 // pred_fallthru
        _
      %p245 = scmp.le.s32.totalorder 1, %s23
      %p246 = scmp.lt.s32.totalorder %s23, 3
      %p247 = pnand %p245, %p246
      %p248 = pneg %p247
      // Predicated region
      $region29: #{tpu_custom_call.1} parent=5 // pred_check
        _
      $region30: #{tpu_custom_call.1} parent=5 // pred_check_branch
        %250 = sbr.rel (%p247) target = $region32
      $region31: #{tpu_custom_call.1} parent=5 // pred_region
        %s251 = ssub.s32 %s23, 1
        %s252 = sand.u32 %s50, 1
        %s253 = scalar_lea.sflag [#allocation3], %s252
        %s254 = sand.u32 %s50, 1
        %s255 = smul.addr %s254, 8
        %s256 = scalar_lea.vmem [#allocation2], %s255
        // Predicated region
        $region33: #{tpu_custom_call.1} parent=31 // pred_check
          %p257 = pneg %p63
        $region34: #{tpu_custom_call.1} parent=31 // pred_check_branch
          %259 = sbr.rel (%p257) target = $region36
        $region35: #{tpu_custom_call.1} parent=31 // pred_region
          %260 = dma.done %s253, 128
        $region36: #{tpu_custom_call.1} parent=31 // pred_fallthru
          _
        %s261 = sand.u32 %s28, 1
        %s262 = scalar_lea.sflag [#allocation6], %s261
        %s263 = sand.u32 %s76, 1
        %s264 = smul.addr %s263, 8
        %s265 = scalar_lea.vmem [#allocation5], %s264
        // Predicated region
        $region37: #{tpu_custom_call.1} parent=31 // pred_check
          %p266 = pneg %p89
        $region38: #{tpu_custom_call.1} parent=31 // pred_check_branch
          %268 = sbr.rel (%p266) target = $region40
        $region39: #{tpu_custom_call.1} parent=31 // pred_region
          %269 = dma.done %s262, 128
        $region40: #{tpu_custom_call.1} parent=31 // pred_fallthru
          _
        %s270 = sand.u32 %s28, 1
        %s271 = scalar_lea.sflag [#allocation6], %s270
        %s272 = sand.u32 %s102, 1
        %s273 = smul.addr %s272, 8
        %s274 = scalar_lea.vmem [#allocation7], %s273
        // Predicated region
        $region41: #{tpu_custom_call.1} parent=31 // pred_check
          %p275 = pneg %p115
        $region42: #{tpu_custom_call.1} parent=31 // pred_check_branch
          %277 = sbr.rel (%p275) target = $region44
        $region43: #{tpu_custom_call.1} parent=31 // pred_region
          %278 = dma.done %s271, 128
        $region44: #{tpu_custom_call.1} parent=31 // pred_fallthru
          _
        %s279 = sand.u32 %s50, 1
        %s280 = scalar_lea.sflag [#allocation3], %s279
        %s281 = sand.u32 %s50, 1
        %s282 = smul.addr %s281, 8
        %s283 = scalar_lea.vmem [#allocation2], %s282
        %p284 = pneg %p63
        %p285 = pneg %p60
        %s286 = sand.u32 %s28, 1
        %s287 = scalar_lea.sflag [#allocation6], %s286
        %s288 = sand.u32 %s76, 1
        %s289 = smul.addr %s288, 8
        %s290 = scalar_lea.vmem [#allocation5], %s289
        %p291 = pneg %p89
        %p292 = pneg %p86
        %s293 = sand.u32 %s28, 1
        %s294 = scalar_lea.sflag [#allocation6], %s293
        %s295 = sand.u32 %s102, 1
        %s296 = smul.addr %s295, 8
        %s297 = scalar_lea.vmem [#allocation7], %s296
        %p298 = pneg %p115
        %p299 = pneg %p112
        %p300 = pneg %p143
        %p301 = pneg %p140
        %s302 = sand.u32 %s130, 1
        %s303 = scalar_lea.sflag [#allocation4], %s302
        %s304 = sand.u32 %s130, 1
        %s305 = smul.addr %s304, 8
        %s306 = scalar_lea.vmem [#allocation8], %s305
        %p307 = pneg %p171
        %p308 = pneg %p168
        %s309 = sand.u32 %s158, 1
        %s310 = scalar_lea.sflag [#allocation10], %s309
        %s311 = sand.u32 %s158, 1
        %s312 = smul.addr %s311, 8
        %s313 = scalar_lea.vmem [#allocation9], %s312
        %v314 = vld [vmem:[%s256] sm:$0xff]
        %v315 = vmul.f32 %v314, 0.17677669
        %v316 = vld [vmem:[%s265] sm:$0xff]
        %vm317 = vcmask 261120
        %v319 = vsel %vm317, %v315, 0
        %v322 = vsel %vm317, %v316, 0
        %324 = vmatprep.subr.mxu0 0.0
        %325 = vmatpush1.xpose.msra.mxu0 0.0
        %326 = vmatprep.subr.mxu0 0.0
        %327 = vmatpush1.xpose.msra.mxu0 0.0
        %328 = vmatprep.subr.mxu0 0.0
        %329 = vmatpush1.xpose.msra.mxu0 0.0
        %330 = vmatprep.subr.mxu0 0.0
        %331 = vmatpush1.xpose.msra.mxu0 0.0
        %332 = vmatprep.subr.mxu0 0.0
        %333 = vmatpush1.xpose.msra.mxu0 0.0
        %334 = vmatprep.subr.mxu0 0.0
        %335 = vmatpush1.xpose.msra.mxu0 0.0
        %336 = vmatprep.subr.mxu0 0.0
        %337 = vmatpush1.xpose.msra.mxu0 0.0
        %338 = vmatprep.subr.mxu0 0.0
        %339 = vmatpush1.xpose.msra.mxu0 0.0
        %340 = vmatprep.subr.mxu0 0.0
        %341 = vmatpush1.xpose.msra.mxu0 0.0
        %342 = vmatprep.subr.mxu0 0.0
        %343 = vmatpush1.xpose.msra.mxu0 0.0
        %344 = vmatprep.subr.mxu0 0.0
        %345 = vmatpush1.xpose.msra.mxu0 0.0
        %346 = vmatprep.subr.mxu0 0.0
        %347 = vmatpush1.xpose.msra.mxu0 0.0
        %348 = vmatprep.subr.mxu0 0.0
        %349 = vmatpush1.xpose.msra.mxu0 0.0
        %350 = vmatprep.subr.mxu0 0.0
        %351 = vmatpush1.xpose.msra.mxu0 0.0
        %352 = vmatprep.subr.mxu0 0.0
        %353 = vmatpush1.xpose.msra.mxu0 0.0
        %354 = vmatprep.subr.mxu0 0.0
        %355 = vmatpush1.xpose.msra.mxu0 %v322
        %356 = vmatprep.subr.mxu0 0.0
        %357 = vmatpush2.xpose.msra.mxu0 0.0
        %358 = vmatprep.subr.mxu0 0.0
        %359 = vmatpush2.xpose.msra.mxu0 0.0
        %360 = vmatprep.subr.mxu0 0.0
        %361 = vmatpush2.xpose.msra.mxu0 0.0
        %362 = vmatprep.subr.mxu0 0.0
        %363 = vmatpush2.xpose.msra.mxu0 0.0
        %364 = vmatprep.subr.mxu0 0.0
        %365 = vmatpush2.xpose.msra.mxu0 0.0
        %366 = vmatprep.subr.mxu0 0.0
        %367 = vmatpush2.xpose.msra.mxu0 0.0
        %368 = vmatprep.subr.mxu0 0.0
        %369 = vmatpush2.xpose.msra.mxu0 0.0
        %370 = vmatprep.subr.mxu0 0.0
        %371 = vmatpush2.xpose.msra.mxu0 0.0
        %372 = vmatprep.subr.mxu0 0.0
        %373 = vmatpush2.xpose.msra.mxu0 0.0
        %374 = vmatprep.subr.mxu0 0.0
        %375 = vmatpush2.xpose.msra.mxu0 0.0
        %376 = vmatprep.subr.mxu0 0.0
        %377 = vmatpush2.xpose.msra.mxu0 0.0
        %378 = vmatprep.subr.mxu0 0.0
        %379 = vmatpush2.xpose.msra.mxu0 0.0
        %380 = vmatprep.subr.mxu0 0.0
        %381 = vmatpush2.xpose.msra.mxu0 0.0
        %382 = vmatprep.subr.mxu0 0.0
        %383 = vmatpush2.xpose.msra.mxu0 0.0
        %384 = vmatprep.subr.mxu0 0.0
        %385 = vmatpush2.xpose.msra.mxu0 0.0
        %386 = vmatprep.subr.mxu0 0.0
        %387 = vmatpush2.xpose.msra.mxu0 0.0
        %388 = vmatprep.mubr.f32.mxu0 0.0
        %389 = vmatmul.mubr.f32.gmra.mxu0 %v319
        %v390 = vpop.f32.mrf.mxu0
        %v391 = vadd.f32 0.0, %v390
        %v392 = vpop.f32.mrf.mxu0
        %393 = vdwg.mxu0
        %vm394 = vcmask 64512
        %v395 = vsel %vm394, %v391, -inf
        %396 = vmax.xlane.f32.xlu0 %v395
        %v397 = vpop.xlane.xlu0 %396
        %v398 = vsub.f32 %v391, %v397
        %v399 = vmul.f32 %v398, 1.442695
        %v400 = vpow.pop %v399
        %v401 = vsel %vm394, %v400, 0.0
        %402 = vadd.xlane.f32.xlu0 %v401
        %v403 = vpop.xlane.xlu0 %402
        %v404 = vrcp.pop %v403
        %v405 = vmul.f32 1.0, %v404
        %v406 = vmul.f32 %v400, %v405
        %407 = vst.msk [vmem:[%s313] sm:$0xff] %vm394, %v406
        %v408 = vld [vmem:[%s274] sm:$0xff]
        %v410 = vsel %vm394, %v400, 0
        %412 = vmatprep.subr.mxu0 0.0
        %413 = vmatpush1.msra.mxu0 0.0
        %414 = vmatprep.subr.mxu0 0.0
        %415 = vmatpush1.msra.mxu0 0.0
        %416 = vmatprep.subr.mxu0 0.0
        %417 = vmatpush1.msra.mxu0 0.0
        %418 = vmatprep.subr.mxu0 0.0
        %419 = vmatpush1.msra.mxu0 0.0
        %420 = vmatprep.subr.mxu0 0.0
        %421 = vmatpush1.msra.mxu0 0.0
        %422 = vmatprep.subr.mxu0 0.0
        %423 = vmatpush1.msra.mxu0 0.0
        %424 = vmatprep.subr.mxu0 0.0
        %425 = vmatpush1.msra.mxu0 0.0
        %426 = vmatprep.subr.mxu0 0.0
        %427 = vmatpush1.msra.mxu0 0.0
        %428 = vmatprep.subr.mxu0 0.0
        %429 = vmatpush1.msra.mxu0 0.0
        %430 = vmatprep.subr.mxu0 0.0
        %431 = vmatpush1.msra.mxu0 0.0
        %432 = vmatprep.subr.mxu0 0.0
        %433 = vmatpush1.msra.mxu0 0.0
        %434 = vmatprep.subr.mxu0 0.0
        %435 = vmatpush1.msra.mxu0 0.0
        %436 = vmatprep.subr.mxu0 0.0
        %437 = vmatpush1.msra.mxu0 0.0
        %438 = vmatprep.subr.mxu0 0.0
        %439 = vmatpush1.msra.mxu0 0.0
        %440 = vmatprep.subr.mxu0 0.0
        %441 = vmatpush1.msra.mxu0 0.0
        %442 = vmatprep.subr.mxu0 0.0
        %443 = vmatpush1.msra.mxu0 %v408
        %444 = vmatprep.subr.mxu0 0.0
        %445 = vmatpush2.msra.mxu0 0.0
        %446 = vmatprep.subr.mxu0 0.0
        %447 = vmatpush2.msra.mxu0 0.0
        %448 = vmatprep.subr.mxu0 0.0
        %449 = vmatpush2.msra.mxu0 0.0
        %450 = vmatprep.subr.mxu0 0.0
        %451 = vmatpush2.msra.mxu0 0.0
        %452 = vmatprep.subr.mxu0 0.0
        %453 = vmatpush2.msra.mxu0 0.0
        %454 = vmatprep.subr.mxu0 0.0
        %455 = vmatpush2.msra.mxu0 0.0
        %456 = vmatprep.subr.mxu0 0.0
        %457 = vmatpush2.msra.mxu0 0.0
        %458 = vmatprep.subr.mxu0 0.0
        %459 = vmatpush2.msra.mxu0 0.0
        %460 = vmatprep.subr.mxu0 0.0
        %461 = vmatpush2.msra.mxu0 0.0
        %462 = vmatprep.subr.mxu0 0.0
        %463 = vmatpush2.msra.mxu0 0.0
        %464 = vmatprep.subr.mxu0 0.0
        %465 = vmatpush2.msra.mxu0 0.0
        %466 = vmatprep.subr.mxu0 0.0
        %467 = vmatpush2.msra.mxu0 0.0
        %468 = vmatprep.subr.mxu0 0.0
        %469 = vmatpush2.msra.mxu0 0.0
        %470 = vmatprep.subr.mxu0 0.0
        %471 = vmatpush2.msra.mxu0 0.0
        %472 = vmatprep.subr.mxu0 0.0
        %473 = vmatpush2.msra.mxu0 0.0
        %474 = vmatprep.subr.mxu0 0.0
        %475 = vmatpush2.msra.mxu0 0.0
        %476 = vmatprep.mubr.f32.mxu0 0.0
        %477 = vmatmul.mubr.f32.gmra.mxu0 %v410
        %v478 = vpop.f32.mrf.mxu0
        %v479 = vadd.f32 0.0, %v478
        %v480 = vpop.f32.mrf.mxu0
        %481 = vdwg.mxu0
        %v482 = vmul.f32 %v479, %v405
        %483 = vst.msk [vmem:[%s306] sm:$0xff] %vm317, %v482
        %s484 = sand.u32 %s130, 1
        %s485 = scalar_lea.sflag [#allocation4], %s484
        %s486 = sand.u32 %s130, 1
        %s487 = smul.addr %s486, 8
        %s488 = scalar_lea.vmem [#allocation8], %s487
        %s489 = sand.u32 %s158, 1
        %s490 = scalar_lea.sflag [#allocation10], %s489
        %s491 = sand.u32 %s158, 1
        %s492 = smul.addr %s491, 8
        %s493 = scalar_lea.vmem [#allocation9], %s492
        // Predicated region
        $region45: #{tpu_custom_call.1} parent=31 // pred_check
          %p494 = pneg %p140
        $region46: #{tpu_custom_call.1} parent=31 // pred_check_branch
          %496 = sbr.rel (%p494) target = $region48
        $region47: #{tpu_custom_call.1} parent=31 // pred_region
          %s498 = ssub.s32 128, 128
          %499 = vsyncadd %s485, %s498
          %s500 = sadd.s32 %s33, %s32
          %s501 = smul.addr %s500, 128
          %s502 = scalar_lea.hbm %s3, %s501
          %s504 = sshll.u32 %s488, 4
          %s505 = int_to_ptr.vmem [resolvable:$true] %s504
          %507 = dma.vmem_to_hbm [thread:$0]  %s505, 128, %s502, %s485
        $region48: #{tpu_custom_call.1} parent=31 // pred_fallthru
          _
        // Predicated region
        $region49: #{tpu_custom_call.1} parent=31 // pred_check
          %p508 = pneg %p168
        $region50: #{tpu_custom_call.1} parent=31 // pred_check_branch
          %510 = sbr.rel (%p508) target = $region52
        $region51: #{tpu_custom_call.1} parent=31 // pred_region
          %s512 = ssub.s32 128, 128
          %513 = vsyncadd %s490, %s512
          %s514 = sadd.s32 %s33, %s32
          %s515 = smul.addr %s514, 128
          %s516 = scalar_lea.hbm %s4, %s515
          %s518 = sshll.u32 %s493, 4
          %s519 = int_to_ptr.vmem [resolvable:$true] %s518
          %521 = dma.vmem_to_hbm [thread:$0]  %s519, 128, %s516, %s490
        $region52: #{tpu_custom_call.1} parent=31 // pred_fallthru
          _
      $region32: #{tpu_custom_call.1} parent=5 // pred_fallthru
        _
      %p522 = scmp.le.s32.totalorder 2, %s23
      // Predicated region
      $region53: #{tpu_custom_call.1} parent=5 // pred_check
        %p523 = pneg %p522
      $region54: #{tpu_custom_call.1} parent=5 // pred_check_branch
        %525 = sbr.rel (%p523) target = $region56
      $region55: #{tpu_custom_call.1} parent=5 // pred_region
        %s526 = ssub.s32 %s23, 2
        // Predicated region
        $region57: #{tpu_custom_call.1} parent=55 // pred_check
          %p527 = pneg %p146
        $region58: #{tpu_custom_call.1} parent=55 // pred_check_branch
          %529 = sbr.rel (%p527) target = $region60
        $region59: #{tpu_custom_call.1} parent=55 // pred_region
          %s530 = sand.u32 %s131, 1
          %s531 = scalar_lea.sflag [#allocation4], %s530
          %s532 = sand.u32 %s131, 1
          %s533 = smul.addr %s532, 8
          %s534 = scalar_lea.vmem [#allocation8], %s533
          %535 = dma.done %s531, 128
        $region60: #{tpu_custom_call.1} parent=55 // pred_fallthru
          _
        // Predicated region
        $region61: #{tpu_custom_call.1} parent=55 // pred_check
          %p536 = pneg %p174
        $region62: #{tpu_custom_call.1} parent=55 // pred_check_branch
          %538 = sbr.rel (%p536) target = $region64
        $region63: #{tpu_custom_call.1} parent=55 // pred_region
          %s539 = sand.u32 %s159, 1
          %s540 = scalar_lea.sflag [#allocation10], %s539
          %s541 = sand.u32 %s159, 1
          %s542 = smul.addr %s541, 8
          %s543 = scalar_lea.vmem [#allocation9], %s542
          %544 = dma.done %s540, 128
        $region64: #{tpu_custom_call.1} parent=55 // pred_fallthru
          _
      $region56: #{tpu_custom_call.1} parent=5 // pred_fallthru
        _
    $region6: #{tpu_custom_call.1} parent=1 // loop_footer
      %s27 = sadd.s32 1, %s23
    $region7: #{tpu_custom_call.1} parent=1 // loop_footer_branch
      %22 = sbr.rel target = $region3
    $region8: #{tpu_custom_call.1} parent=1 // loop_exit
      _
    %545 = vsyncpa [#allocation3], 1
    %s546 = scalar_lea.sflag [#allocation3], 1
    %547 = vsyncpa %s546, 1
    %548 = vsyncpa [#allocation6], 1
    %s549 = scalar_lea.sflag [#allocation6], 1
    %550 = vsyncpa %s549, 1
    %551 = vsyncpa [#allocation4], 1
    %s552 = scalar_lea.sflag [#allocation4], 1
    %553 = vsyncpa %s552, 1
    %554 = vsyncpa [#allocation10], 1
    %s555 = scalar_lea.sflag [#allocation10], 1
    %556 = vsyncpa %s555, 1

</llo_original>
